<compile_context>
chip_gen: v7x
topology: tpu7x:2x2x1
jax: 0.10.0
libtpu: 0.0.40
codegen_flags: <defaults>
</compile_context>

<pallas_src>
from functools import partial

import jax
import jax.numpy as jnp
from jax import lax
from jax.experimental import pallas as pl
from jax.experimental.pallas import tpu as pltpu


def _round_up(x, m):
    return (x + m - 1) // m * m


def _pick_tile_q(nq, max_tile=512):
    """Largest query tile (multiple of 8) that divides Nq; else the full Nq."""
    if nq <= max_tile:
        return nq
    for t in (512, 384, 256, 128, 64, 32, 16, 8):
        if t <= max_tile and nq % t == 0:
            return t
    return nq


# ---------------------------------------------------------------------------
# Fused kernel: one (batch, q-tile) per grid step.
# ---------------------------------------------------------------------------

def _cross_attention_kernel(x_ref, c_ref, wq_ref, wk_ref, wv_ref, wo_ref,
                            bo_ref, o_ref, *, heads, dim_head):
    """x_ref: (1, TQ, qd)   c_ref: (1, Nk, cd)
    wq_ref: (qd, inner) bf16 (scale folded)   wk/wv_ref: (cd, inner) bf16
    wo_ref: (inner, qd_pad) bf16   bo_ref: (1, qd_pad) f32
    o_ref : (1, TQ, qd_pad)
    """
    x = x_ref[0].astype(jnp.bfloat16)      # (TQ, qd)
    c = c_ref[0].astype(jnp.bfloat16)      # (Nk, cd)

    # Flat all-heads projections: MXU N = heads*dim_head, f32 accumulate.
    q = jnp.dot(x, wq_ref[...], preferred_element_type=jnp.float32)   # (TQ, inner)
    k = jnp.dot(c, wk_ref[...], preferred_element_type=jnp.float32)   # (Nk, inner)
    v = jnp.dot(c, wv_ref[...], preferred_element_type=jnp.float32)   # (Nk, inner)
    q = q.astype(jnp.bfloat16)
    k = k.astype(jnp.bfloat16)
    v = v.astype(jnp.bfloat16)

    # Per-head attention (static unroll; head count is small).
    ov_parts = []
    for h in range(heads):
        lo = h * dim_head
        qh = q[:, lo:lo + dim_head]        # (TQ, dh)
        kh = k[:, lo:lo + dim_head]        # (Nk, dh)
        vh = v[:, lo:lo + dim_head]        # (Nk, dh)

        # sim = q @ k^T, contracting last dims directly (no k.T relayout).
        sim = lax.dot_general(qh, kh, (((1,), (1,)), ((), ())),
                              preferred_element_type=jnp.float32)      # (TQ, Nk)
        sim = sim - jnp.max(sim, axis=-1, keepdims=True)
        p = jnp.exp(sim)
        denom = jnp.sum(p, axis=-1, keepdims=True)
        inv = pl.reciprocal(denom, approx=True)                        # EUP vrcp

        ov = jnp.dot(p.astype(jnp.bfloat16), vh,
                     preferred_element_type=jnp.float32)               # (TQ, dh)
        ov_parts.append((ov * inv).astype(jnp.bfloat16))

    ov_all = ov_parts[0] if heads == 1 else jnp.concatenate(ov_parts, axis=-1)

    # Single fused output projection over all heads.
    out = jnp.dot(ov_all, wo_ref[...], preferred_element_type=jnp.float32)
    o_ref[0] = (out + bo_ref[...]).astype(o_ref.dtype)


# ---------------------------------------------------------------------------
# One-time host-side parameter prep.
# ---------------------------------------------------------------------------

def prepare_cross_attention_params(params, heads, dim_head,
                                   weight_dtype=jnp.bfloat16):
    """Fold scale into Wq, cast weights to bf16, pad Wo/bias to 128-lane output."""
    out_dim = params["wo"].shape[1]
    qd_pad = _round_up(out_dim, 128)
    scale = dim_head ** (-0.5)

    wo = params["wo"]
    bo = params["bo"].reshape(1, out_dim)
    if qd_pad != out_dim:
        wo = jnp.pad(wo, ((0, 0), (0, qd_pad - out_dim)))
        bo = jnp.pad(bo, ((0, 0), (0, qd_pad - out_dim)))

    return {
        "wq": (params["wq"] * scale).astype(weight_dtype),   # (qd, inner)
        "wk": params["wk"].astype(weight_dtype),              # (cd, inner)
        "wv": params["wv"].astype(weight_dtype),              # (cd, inner)
        "wo": wo.astype(weight_dtype),                         # (inner, qd_pad)
        "bo": bo.astype(jnp.float32),                          # (1, qd_pad)
    }


# ---------------------------------------------------------------------------
# Forward wrapper (single pallas_call).
# ---------------------------------------------------------------------------

def cross_attention_forward(x, context, prepared, heads, dim_head, tile_q=None):
    B, Nq, qd = x.shape
    _, Nk, cd = context.shape
    inner = heads * dim_head

    wq, wk, wv = prepared["wq"], prepared["wk"], prepared["wv"]
    wo, bo = prepared["wo"], prepared["bo"]
    qd_pad = wo.shape[1]

    if tile_q is None:
        tile_q = _pick_tile_q(Nq)
    n_q_tiles = Nq // tile_q
    assert tile_q * n_q_tiles == Nq, "tile_q must divide Nq"

    # Explicit scoped-VMEM budget from the actual block sizes (+ headroom).
    wbytes = jnp.dtype(wq.dtype).itemsize
    blocks = (2 * tile_q * qd * 4                                  # x (x2 buffers)
              + 2 * Nk * cd * 4                                    # context (x2)
              + 2 * (qd * inner + 2 * cd * inner + inner * qd_pad) * wbytes
              + 2 * qd_pad * 4                                     # bias
              + 2 * tile_q * qd_pad * 4)                           # out (x2)
    interm = ((tile_q + 2 * Nk) * inner * 6                        # q/k/v f32+bf16
              + tile_q * Nk * 12                                   # sim / p temps
              + tile_q * (inner * 2 + qd_pad * 4))                 # ov_all / out
    vmem_limit = min(max(int(1.5 * (blocks + interm)) + (2 << 20), 32 << 20),
                     64 << 20)

    flops = 2 * B * (Nq * qd * inner
                     + 2 * Nk * cd * inner
                     + 2 * heads * Nq * Nk * dim_head
                     + Nq * inner * qd_pad)
    bytes_accessed = (4 * (x.size + context.size + bo.size + B * Nq * qd_pad)
                      + wbytes * (wq.size + wk.size + wv.size + wo.size))
    cost = pl.CostEstimate(flops=flops,
                           transcendentals=B * heads * Nq * Nk,
                           bytes_accessed=bytes_accessed)

    kern = partial(_cross_attention_kernel, heads=heads, dim_head=dim_head)

    out = pl.pallas_call(
        kern,
        out_shape=jax.ShapeDtypeStruct((B, Nq, qd_pad), x.dtype),
        grid=(B, n_q_tiles),
        in_specs=[
            pl.BlockSpec((1, tile_q, qd), lambda b, t: (b, t, 0)),   # x
            pl.BlockSpec((1, Nk, cd), lambda b, t: (b, 0, 0)),       # context
            pl.BlockSpec((qd, inner), lambda b, t: (0, 0)),          # wq (resident)
            pl.BlockSpec((cd, inner), lambda b, t: (0, 0)),          # wk
            pl.BlockSpec((cd, inner), lambda b, t: (0, 0)),          # wv
            pl.BlockSpec((inner, qd_pad), lambda b, t: (0, 0)),      # wo
            pl.BlockSpec((1, qd_pad), lambda b, t: (0, 0)),          # bo
        ],
        out_specs=pl.BlockSpec((1, tile_q, qd_pad), lambda b, t: (b, t, 0)),
        compiler_params=pltpu.CompilerParams(
            dimension_semantics=("parallel", "parallel"),
            vmem_limit_bytes=vmem_limit),
        cost_estimate=cost,
    )(x, context, wq, wk, wv, wo, bo)

    return out[..., :qd] if qd_pad != qd else out


# ---------------------------------------------------------------------------
# Pure-JAX reference (f32) for correctness check -- uses original flat params.
# ---------------------------------------------------------------------------

def cross_attention_reference(x, context, params, heads, dim_head):
    B, Nq, _ = x.shape
    _, Nk, _ = context.shape
    inner = heads * dim_head
    scale = dim_head ** (-0.5)
    q = x @ params["wq"]
    k = context @ params["wk"]
    v = context @ params["wv"]

    def split(t, n):
        return t.reshape(B, n, heads, dim_head).transpose(0, 2, 1, 3)

    qh, kh, vh = split(q, Nq), split(k, Nk), split(v, Nk)
    sim = jnp.einsum("bhid,bhjd->bhij", qh, kh) * scale
    attn = jax.nn.softmax(sim, axis=-1)
    out = jnp.einsum("bhij,bhjd->bhid", attn, vh)
    out = out.transpose(0, 2, 1, 3).reshape(B, Nq, inner)
    return out @ params["wo"] + params["bo"]


# ---------------------------------------------------------------------------
# Main
# ---------------------------------------------------------------------------

if __name__ == "__main__":
    B, Nq, Nk = 2, 8, 8
    query_dim, context_dim = 32, 48
    heads, dim_head = 2, 64
    inner = heads * dim_head

    key = jax.random.PRNGKey(0)
    kx, kc, k1, k2, k3, k4, k5 = jax.random.split(key, 7)

    x = jax.random.normal(kx, (B, Nq, query_dim), dtype=jnp.float32)
    context = jax.random.normal(kc, (B, Nk, context_dim), dtype=jnp.float32)

    # Parameters stored as (in_features, out_features) — already transposed
    # relative to torch.nn.Linear's (out, in).
    params = {
        "wq": jax.random.normal(k1, (query_dim, inner), jnp.float32) * 0.05,
        "wk": jax.random.normal(k2, (context_dim, inner), jnp.float32) * 0.05,
        "wv": jax.random.normal(k3, (context_dim, inner), jnp.float32) * 0.05,
        "wo": jax.random.normal(k4, (inner, query_dim), jnp.float32) * 0.05,
        "bo": jax.random.normal(k5, (query_dim,), jnp.float32) * 0.05,
    }

    prepared = prepare_cross_attention_params(params, heads, dim_head)

    out = cross_attention_forward(x, context, prepared, heads, dim_head)
    out = jax.block_until_ready(out)

    ref = cross_attention_reference(x, context, params, heads, dim_head)
    assert out.shape == (B, Nq, query_dim)
    # bf16 MXU operands + pl.reciprocal(approx=True) => looser tolerance vs the
    # pure-f32 reference (inference-grade accuracy).
    assert jnp.allclose(out, ref, atol=2e-2, rtol=2e-2), "mismatch vs reference"

    print("KERNEL_OK")
</pallas_src>

<mosaic_0001>
module attributes {stable_mosaic.version = 11 : i64} {
  func.func @_cross_attention_kernel(%arg0: i32, %arg1: i32, %arg2: memref<1x8x32xf32, #tpu.memory_space<vmem>>, %arg3: memref<1x8x48xf32, #tpu.memory_space<vmem>>, %arg4: memref<32x128xbf16, #tpu.memory_space<vmem>>, %arg5: memref<48x128xbf16, #tpu.memory_space<vmem>>, %arg6: memref<48x128xbf16, #tpu.memory_space<vmem>>, %arg7: memref<128x128xbf16, #tpu.memory_space<vmem>>, %arg8: memref<1x128xf32, #tpu.memory_space<vmem>>, %arg9: memref<1x8x128xf32, #tpu.memory_space<vmem>>) attributes {dimension_semantics = [#tpu.dimension_semantics<parallel>, #tpu.dimension_semantics<parallel>], iteration_bounds = array<i64: 2, 1>, scalar_prefetch = 0 : i64, scratch_operands = 0 : i64, tpu.core_type = #tpu.core_type<tc>, window_params = [{transform_indices = @transform_0, window_bounds = array<i64: 1, 8, 32>}, {transform_indices = @transform_1, window_bounds = array<i64: 1, 8, 48>}, {pipeline_mode = #tpu.pipeline_mode<synchronous>, transform_indices = @transform_2, window_bounds = array<i64: 32, 128>}, {pipeline_mode = #tpu.pipeline_mode<synchronous>, transform_indices = @transform_3, window_bounds = array<i64: 48, 128>}, {pipeline_mode = #tpu.pipeline_mode<synchronous>, transform_indices = @transform_4, window_bounds = array<i64: 48, 128>}, {pipeline_mode = #tpu.pipeline_mode<synchronous>, transform_indices = @transform_5, window_bounds = array<i64: 128, 128>}, {pipeline_mode = #tpu.pipeline_mode<synchronous>, transform_indices = @transform_6, window_bounds = array<i64: 1, 128>}, {transform_indices = @transform_7, window_bounds = array<i64: 1, 8, 128>}]} {
    %c0 = arith.constant 0 : index
    %c0_0 = arith.constant 0 : index
    %c0_1 = arith.constant 0 : index
    %0 = vector.load %arg2[%c0, %c0_0, %c0_1] : memref<1x8x32xf32, #tpu.memory_space<vmem>>, vector<1x8x32xf32>
    %1 = vector.shape_cast %0 : vector<1x8x32xf32> to vector<8x32xf32>
    %2 = arith.truncf %1 : vector<8x32xf32> to vector<8x32xbf16>
    %c0_2 = arith.constant 0 : index
    %c0_3 = arith.constant 0 : index
    %c0_4 = arith.constant 0 : index
    %3 = vector.load %arg3[%c0_2, %c0_3, %c0_4] : memref<1x8x48xf32, #tpu.memory_space<vmem>>, vector<1x8x48xf32>
    %4 = vector.shape_cast %3 : vector<1x8x48xf32> to vector<8x48xf32>
    %5 = arith.truncf %4 : vector<8x48xf32> to vector<8x48xbf16>
    %c0_5 = arith.constant 0 : index
    %c0_6 = arith.constant 0 : index
    %6 = vector.load %arg4[%c0_5, %c0_6] : memref<32x128xbf16, #tpu.memory_space<vmem>>, vector<32x128xbf16>
    %cst = arith.constant dense<0.000000e+00> : vector<8x128xf32>
    %7 = tpu.matmul %2, %6, %cst {dimension_numbers = #tpu.dot_dimension_numbers<[1], [0], [0], [1], [0, 0, 1, 1], [], []>} : vector<8x32xbf16>, vector<32x128xbf16>, vector<8x128xf32> -> vector<8x128xf32>
    %c0_7 = arith.constant 0 : index
    %c0_8 = arith.constant 0 : index
    %8 = vector.load %arg5[%c0_7, %c0_8] : memref<48x128xbf16, #tpu.memory_space<vmem>>, vector<48x128xbf16>
    %cst_9 = arith.constant dense<0.000000e+00> : vector<8x128xf32>
    %9 = tpu.matmul %5, %8, %cst_9 {dimension_numbers = #tpu.dot_dimension_numbers<[1], [0], [0], [1], [0, 0, 1, 1], [], []>} : vector<8x48xbf16>, vector<48x128xbf16>, vector<8x128xf32> -> vector<8x128xf32>
    %c0_10 = arith.constant 0 : index
    %c0_11 = arith.constant 0 : index
    %10 = vector.load %arg6[%c0_10, %c0_11] : memref<48x128xbf16, #tpu.memory_space<vmem>>, vector<48x128xbf16>
    %cst_12 = arith.constant dense<0.000000e+00> : vector<8x128xf32>
    %11 = tpu.matmul %5, %10, %cst_12 {dimension_numbers = #tpu.dot_dimension_numbers<[1], [0], [0], [1], [0, 0, 1, 1], [], []>} : vector<8x48xbf16>, vector<48x128xbf16>, vector<8x128xf32> -> vector<8x128xf32>
    %12 = arith.truncf %7 : vector<8x128xf32> to vector<8x128xbf16>
    %13 = arith.truncf %9 : vector<8x128xf32> to vector<8x128xbf16>
    %14 = arith.truncf %11 : vector<8x128xf32> to vector<8x128xbf16>
    %15 = vector.extract_strided_slice %12 {offsets = [0, 0], sizes = [8, 64], strides = [1, 1]} : vector<8x128xbf16> to vector<8x64xbf16>
    %16 = vector.extract_strided_slice %13 {offsets = [0, 0], sizes = [8, 64], strides = [1, 1]} : vector<8x128xbf16> to vector<8x64xbf16>
    %17 = vector.extract_strided_slice %14 {offsets = [0, 0], sizes = [8, 64], strides = [1, 1]} : vector<8x128xbf16> to vector<8x64xbf16>
    %cst_13 = arith.constant dense<0.000000e+00> : vector<8x8xf32>
    %18 = tpu.matmul %15, %16, %cst_13 {dimension_numbers = #tpu.dot_dimension_numbers<[1], [1], [0], [0], [0, 0, 1, 0], [], []>} : vector<8x64xbf16>, vector<8x64xbf16>, vector<8x8xf32> -> vector<8x8xf32>
    %cst_14 = arith.constant dense<0xFF800000> : vector<8xf32>
    %19 = vector.multi_reduction <maximumf>, %18, %cst_14 [1] : vector<8x8xf32> to vector<8xf32>
    %20 = vector.shape_cast %19 : vector<8xf32> to vector<8x1xf32>
    %21 = vector.broadcast %20 : vector<8x1xf32> to vector<8x8xf32>
    %22 = arith.subf %18, %21 : vector<8x8xf32>
    %23 = math.exp %22 : vector<8x8xf32>
    %cst_15 = arith.constant dense<0.000000e+00> : vector<8xf32>
    %24 = vector.multi_reduction <add>, %23, %cst_15 [1] : vector<8x8xf32> to vector<8xf32>
    %25 = vector.shape_cast %24 : vector<8xf32> to vector<8x1xf32>
    %26 = tpu.reciprocal %25 {approx = true} : vector<8x1xf32> -> vector<8x1xf32>
    %27 = arith.truncf %23 : vector<8x8xf32> to vector<8x8xbf16>
    %cst_16 = arith.constant dense<0.000000e+00> : vector<8x64xf32>
    %28 = tpu.matmul %27, %17, %cst_16 {dimension_numbers = #tpu.dot_dimension_numbers<[1], [0], [0], [1], [0, 0, 1, 1], [], []>} : vector<8x8xbf16>, vector<8x64xbf16>, vector<8x64xf32> -> vector<8x64xf32>
    %29 = vector.broadcast %26 : vector<8x1xf32> to vector<8x64xf32>
    %30 = arith.mulf %28, %29 : vector<8x64xf32>
    %31 = arith.truncf %30 : vector<8x64xf32> to vector<8x64xbf16>
    %32 = vector.extract_strided_slice %12 {offsets = [0, 64], sizes = [8, 64], strides = [1, 1]} : vector<8x128xbf16> to vector<8x64xbf16>
    %33 = vector.extract_strided_slice %13 {offsets = [0, 64], sizes = [8, 64], strides = [1, 1]} : vector<8x128xbf16> to vector<8x64xbf16>
    %34 = vector.extract_strided_slice %14 {offsets = [0, 64], sizes = [8, 64], strides = [1, 1]} : vector<8x128xbf16> to vector<8x64xbf16>
    %cst_17 = arith.constant dense<0.000000e+00> : vector<8x8xf32>
    %35 = tpu.matmul %32, %33, %cst_17 {dimension_numbers = #tpu.dot_dimension_numbers<[1], [1], [0], [0], [0, 0, 1, 0], [], []>} : vector<8x64xbf16>, vector<8x64xbf16>, vector<8x8xf32> -> vector<8x8xf32>
    %cst_18 = arith.constant dense<0xFF800000> : vector<8xf32>
    %36 = vector.multi_reduction <maximumf>, %35, %cst_18 [1] : vector<8x8xf32> to vector<8xf32>
    %37 = vector.shape_cast %36 : vector<8xf32> to vector<8x1xf32>
    %38 = vector.broadcast %37 : vector<8x1xf32> to vector<8x8xf32>
    %39 = arith.subf %35, %38 : vector<8x8xf32>
    %40 = math.exp %39 : vector<8x8xf32>
    %cst_19 = arith.constant dense<0.000000e+00> : vector<8xf32>
    %41 = vector.multi_reduction <add>, %40, %cst_19 [1] : vector<8x8xf32> to vector<8xf32>
    %42 = vector.shape_cast %41 : vector<8xf32> to vector<8x1xf32>
    %43 = tpu.reciprocal %42 {approx = true} : vector<8x1xf32> -> vector<8x1xf32>
    %44 = arith.truncf %40 : vector<8x8xf32> to vector<8x8xbf16>
    %cst_20 = arith.constant dense<0.000000e+00> : vector<8x64xf32>
    %45 = tpu.matmul %44, %34, %cst_20 {dimension_numbers = #tpu.dot_dimension_numbers<[1], [0], [0], [1], [0, 0, 1, 1], [], []>} : vector<8x8xbf16>, vector<8x64xbf16>, vector<8x64xf32> -> vector<8x64xf32>
    %46 = vector.broadcast %43 : vector<8x1xf32> to vector<8x64xf32>
    %47 = arith.mulf %45, %46 : vector<8x64xf32>
    %48 = arith.truncf %47 : vector<8x64xf32> to vector<8x64xbf16>
    %49 = tpu.concatenate %31, %48 in 1 : vector<8x64xbf16>, vector<8x64xbf16> -> vector<8x128xbf16>
    %c0_21 = arith.constant 0 : index
    %c0_22 = arith.constant 0 : index
    %50 = vector.load %arg7[%c0_21, %c0_22] : memref<128x128xbf16, #tpu.memory_space<vmem>>, vector<128x128xbf16>
    %cst_23 = arith.constant dense<0.000000e+00> : vector<8x128xf32>
    %51 = tpu.matmul %49, %50, %cst_23 {dimension_numbers = #tpu.dot_dimension_numbers<[1], [0], [0], [1], [0, 0, 1, 1], [], []>} : vector<8x128xbf16>, vector<128x128xbf16>, vector<8x128xf32> -> vector<8x128xf32>
    %c0_24 = arith.constant 0 : index
    %c0_25 = arith.constant 0 : index
    %52 = vector.load %arg8[%c0_24, %c0_25] : memref<1x128xf32, #tpu.memory_space<vmem>>, vector<1x128xf32>
    %53 = vector.broadcast %52 : vector<1x128xf32> to vector<8x128xf32>
    %54 = arith.addf %51, %53 : vector<8x128xf32>
    %c0_26 = arith.constant 0 : index
    %c0_27 = arith.constant 0 : index
    %c0_28 = arith.constant 0 : index
    %55 = vector.load %arg9[%c0_26, %c0_27, %c0_28] : memref<1x8x128xf32, #tpu.memory_space<vmem>>, vector<1x8x128xf32>
    %56 = vector.shape_cast %55 : vector<1x8x128xf32> to vector<8x128xf32>
    %57 = vector.shape_cast %54 : vector<8x128xf32> to vector<1x8x128xf32>
    tpu.vector_store %arg9[%c0_26, %c0_27, %c0_28], %57 {strides = array<i32>} : memref<1x8x128xf32, #tpu.memory_space<vmem>>, vector<1x8x128xf32>,
    return
  }
  func.func @transform_0(%arg0: i32, %arg1: i32) -> (i32, i32, i32) {
    %c0_i32 = arith.constant 0 : i32
    %c0_i32_0 = arith.constant 0 : i32
    return %arg0, %arg1, %c0_i32 : i32, i32, i32
  }
  func.func @transform_1(%arg0: i32, %arg1: i32) -> (i32, i32, i32) {
    %c0_i32 = arith.constant 0 : i32
    %c0_i32_0 = arith.constant 0 : i32
    %c0_i32_1 = arith.constant 0 : i32
    return %arg0, %c0_i32, %c0_i32_0 : i32, i32, i32
  }
  func.func @transform_2(%arg0: i32, %arg1: i32) -> (i32, i32) {
    %c0_i32 = arith.constant 0 : i32
    %c0_i32_0 = arith.constant 0 : i32
    %c0_i32_1 = arith.constant 0 : i32
    return %c0_i32, %c0_i32_0 : i32, i32
  }
  func.func @transform_3(%arg0: i32, %arg1: i32) -> (i32, i32) {
    %c0_i32 = arith.constant 0 : i32
    %c0_i32_0 = arith.constant 0 : i32
    %c0_i32_1 = arith.constant 0 : i32
    return %c0_i32, %c0_i32_0 : i32, i32
  }
  func.func @transform_4(%arg0: i32, %arg1: i32) -> (i32, i32) {
    %c0_i32 = arith.constant 0 : i32
    %c0_i32_0 = arith.constant 0 : i32
    %c0_i32_1 = arith.constant 0 : i32
    return %c0_i32, %c0_i32_0 : i32, i32
  }
  func.func @transform_5(%arg0: i32, %arg1: i32) -> (i32, i32) {
    %c0_i32 = arith.constant 0 : i32
    %c0_i32_0 = arith.constant 0 : i32
    %c0_i32_1 = arith.constant 0 : i32
    return %c0_i32, %c0_i32_0 : i32, i32
  }
  func.func @transform_6(%arg0: i32, %arg1: i32) -> (i32, i32) {
    %c0_i32 = arith.constant 0 : i32
    %c0_i32_0 = arith.constant 0 : i32
    %c0_i32_1 = arith.constant 0 : i32
    return %c0_i32, %c0_i32_0 : i32, i32
  }
  func.func @transform_7(%arg0: i32, %arg1: i32) -> (i32, i32, i32) {
    %c0_i32 = arith.constant 0 : i32
    %c0_i32_0 = arith.constant 0 : i32
    return %arg0, %arg1, %c0_i32 : i32, i32, i32
  }
}

</mosaic_0001>

<llo_original>
// kernel: tpu_custom_call.1
$region0: #{tpu_custom_call.1}
  #allocation0 [shape = 'u32[]', space=smem, size = 0x4, offset = 0x4, fixed_abs, tag = 'smem constant byte address 0x4 - core index']
  #allocation1 [shape = 'u32[144,128]{1,0:T(1,128)}', space=vmem, size = 0x12000, scoped, tag = 'internal scratch']
  %s0 = inlined_call_operand.hbm [shape: f32[2,8,32], index: 0, kind: input, shape index: {}]
  %s1 = inlined_call_operand.hbm [shape: f32[2,8,48], index: 1, kind: input, shape index: {}]
  %s2 = inlined_call_operand.hbm [shape: bf16[32,128], index: 2, kind: input, shape index: {}]
  %s3 = inlined_call_operand.hbm [shape: bf16[48,128], index: 3, kind: input, shape index: {}]
  %s4 = inlined_call_operand.hbm [shape: bf16[48,128], index: 4, kind: input, shape index: {}]
  %s5 = inlined_call_operand.hbm [shape: bf16[128,128], index: 5, kind: input, shape index: {}]
  %s6 = inlined_call_operand.vmem [shape: f32[1,128], index: 6, kind: input, shape index: {}]
  %s7 = inlined_call_operand.hbm [shape: f32[2,8,128], index: 7, kind: output, shape index: {}]
  %s8 = sld [smem:[#allocation0]]
  $region85: #{tpu_custom_call.1} parent=0
    _
  %s10 = ssub.s32 1, %s8
  %s11 = scalar_select 0, %s10, %s8
  $region1: #{tpu_custom_call.1} parent=0
    #allocation2 [shape = 'u8[8192]{0}', space=vmem, size = 0x2000, scoped, tag = 'input window, operand 0']
    #allocation3 [shape = 's32[2]{0}', space=sflag, size = 0x8, scoped, tag = 'scoped memory for tpu_custom_call.1']
    #allocation4 [shape = 's32[2]{0}', space=sflag, size = 0x8, scoped, tag = 'scoped memory for tpu_custom_call.1']
    #allocation5 [shape = 'u8[8192]{0}', space=vmem, size = 0x2000, scoped, tag = 'input window, operand 1']
    #allocation6 [shape = 's32[2]{0}', space=sflag, size = 0x8, scoped, tag = 'scoped memory for tpu_custom_call.1']
    #allocation7 [shape = 'u8[8192]{0}', space=vmem, size = 0x2000, scoped, tag = 'input window, operand 2, single buffered']
    #allocation8 [shape = 'u8[12288]{0}', space=vmem, size = 0x3000, scoped, tag = 'input window, operand 3, single buffered']
    #allocation9 [shape = 's32[1]{0}', space=sflag, size = 0x4, scoped, tag = 'scoped memory for tpu_custom_call.1']
    #allocation10 [shape = 'u8[12288]{0}', space=vmem, size = 0x3000, scoped, tag = 'input window, operand 4, single buffered']
    #allocation11 [shape = 'u8[32768]{0}', space=vmem, size = 0x8000, scoped, tag = 'input window, operand 5, single buffered']
    #allocation12 [shape = 's32[1]{0}', space=sflag, size = 0x4, scoped, tag = 'scoped memory for tpu_custom_call.1']
    #allocation13 [shape = 'u8[8192]{0}', space=vmem, size = 0x2000, scoped, tag = 'output window, operand 0']
    %12 = vsyncpa [#allocation3], 0
    %s13 = scalar_lea.sflag [#allocation3], 1
    %14 = vsyncpa %s13, 0
    %15 = vsyncpa [#allocation6], 0
    %s16 = scalar_lea.sflag [#allocation6], 1
    %17 = vsyncpa %s16, 0
    %18 = vsyncpa [#allocation9], 0
    %19 = vsyncpa [#allocation12], 0
    %20 = vsyncpa [#allocation4], 0
    %s21 = scalar_lea.sflag [#allocation4], 1
    %22 = vsyncpa %s21, 0
    loop: start=0, step=1, limit=4
    $region2: #{tpu_custom_call.1} parent=1 // loop_pre_header
      _
    $region3: #{tpu_custom_call.1} parent=1 // loop_header
      %s24 = sphi 0, %s28
      %p25 = scmp.ge.s32.totalorder %s24, 4
      %s31 = sphi 0, %s43
      %s32 = sphi 0, %s39
      %s33 = sphi 0, %s31
      %s34 = sphi 0, %s32
      %s35 = sphi 0, %s33
      %s36 = sphi 0, %s34
      %s48 = sphi 0, %s50
      %s51 = sphi 0, %s48
      %s52 = sphi 0, %s51
      %s68 = sphi 0, %s52
      %s74 = sphi 0, %s76
      %s77 = sphi 0, %s74
      %s78 = sphi 0, %s77
      %s94 = sphi 0, %s78
      %s98 = sphi 0, %s98
      %s100 = sphi 0, %s98
      %s101 = sphi 0, %s100
      %s115 = sphi 0, %s101
      %s119 = sphi 0, %s119
      %s121 = sphi 0, %s119
      %s122 = sphi 0, %s121
      %s136 = sphi 0, %s122
      %s140 = sphi 0, %s140
      %s142 = sphi 0, %s140
      %s143 = sphi 0, %s142
      %s157 = sphi 0, %s143
      %s161 = sphi 0, %s161
      %s163 = sphi 0, %s161
      %s164 = sphi 0, %s163
      %s178 = sphi 0, %s164
      %s182 = sphi 0, %s182
      %s184 = sphi 0, %s182
      %s185 = sphi 0, %s184
      %s199 = sphi 0, %s185
      %s207 = sphi 0, %s209
      %s210 = sphi 0, %s207
      %s211 = sphi 0, %s210
      %s227 = sphi 0, %s211
    $region4: #{tpu_custom_call.1} parent=1 // loop_header_branch
      %27 = sbr.rel (%p25) target = $region8
    $region5: #{tpu_custom_call.1} parent=1 // loop_body
      %s29 = ssub.s32 %s24, 1
      %s30 = ssub.s32 %s24, 2
      %s37 = sadd.s32 1, %s32
      %p38 = scmp.ge.s32.totalorder %s37, 1
      %s39 = scalar_select %p38, 0, %s37
      %s40 = sadd.s32 1, %s31
      %s41 = scalar_select %p38, %s40, %s31
      %p42 = scmp.ge.s32.totalorder %s41, 2
      %s43 = scalar_select %p42, 0, %s41
      %s44 = ssub.s32 %s31, %s43
      %s45 = ssub.s32 %s32, %s39
      %s46 = sor.u32 %s44, %s45
      %p47 = scmp.eq.s32.totalorder %s46, 0
      %s49 = sadd.s32 %s48, 1
      %s50 = scalar_select %p47, %s48, %s49
      %p53 = pneg %p47
      %p54 = scmp.eq.s32.totalorder %s24, 1
      %p55 = por %p53, %p54
      %p56 = scmp.ne.s32.totalorder %s48, %s51
      %p57 = scmp.eq.s32.totalorder %s24, 0
      %p58 = por %p56, %p57
      %p59 = scmp.ne.s32.totalorder %s48, %s51
      %p60 = scmp.eq.s32.totalorder %s29, 1
      %p61 = por %p59, %p60
      %p62 = scmp.ne.s32.totalorder %s51, %s52
      %p63 = scmp.eq.s32.totalorder %s29, 0
      %p64 = por %p62, %p63
      %p65 = scmp.ne.s32.totalorder %s51, %s52
      %p66 = scmp.eq.s32.totalorder %s30, 1
      %p67 = por %p65, %p66
      %p69 = scmp.ne.s32.totalorder %s52, %s68
      %p70 = scmp.eq.s32.totalorder %s30, 0
      %p71 = por %p69, %p70
      %s72 = ssub.s32 %s31, %s43
      %p73 = scmp.eq.s32.totalorder %s72, 0
      %s75 = sadd.s32 %s74, 1
      %s76 = scalar_select %p73, %s74, %s75
      %p79 = pneg %p73
      %p80 = scmp.eq.s32.totalorder %s24, 1
      %p81 = por %p79, %p80
      %p82 = scmp.ne.s32.totalorder %s74, %s77
      %p83 = scmp.eq.s32.totalorder %s24, 0
      %p84 = por %p82, %p83
      %p85 = scmp.ne.s32.totalorder %s74, %s77
      %p86 = scmp.eq.s32.totalorder %s29, 1
      %p87 = por %p85, %p86
      %p88 = scmp.ne.s32.totalorder %s77, %s78
      %p89 = scmp.eq.s32.totalorder %s29, 0
      %p90 = por %p88, %p89
      %p91 = scmp.ne.s32.totalorder %s77, %s78
      %p92 = scmp.eq.s32.totalorder %s30, 1
      %p93 = por %p91, %p92
      %p95 = scmp.ne.s32.totalorder %s78, %s94
      %p96 = scmp.eq.s32.totalorder %s30, 0
      %p97 = por %p95, %p96
      %s99 = sadd.s32 %s98, 1
      %p102 = scmp.eq.s32.totalorder %s24, 1
      %p103 = scmp.ne.s32.totalorder %s98, %s100
      %p104 = scmp.eq.s32.totalorder %s24, 0
      %p105 = por %p103, %p104
      %p106 = scmp.ne.s32.totalorder %s98, %s100
      %p107 = scmp.eq.s32.totalorder %s29, 1
      %p108 = por %p106, %p107
      %p109 = scmp.ne.s32.totalorder %s100, %s101
      %p110 = scmp.eq.s32.totalorder %s29, 0
      %p111 = por %p109, %p110
      %p112 = scmp.ne.s32.totalorder %s100, %s101
      %p113 = scmp.eq.s32.totalorder %s30, 1
      %p114 = por %p112, %p113
      %p116 = scmp.ne.s32.totalorder %s101, %s115
      %p117 = scmp.eq.s32.totalorder %s30, 0
      %p118 = por %p116, %p117
      %s120 = sadd.s32 %s119, 1
      %p123 = scmp.eq.s32.totalorder %s24, 1
      %p124 = scmp.ne.s32.totalorder %s119, %s121
      %p125 = scmp.eq.s32.totalorder %s24, 0
      %p126 = por %p124, %p125
      %p127 = scmp.ne.s32.totalorder %s119, %s121
      %p128 = scmp.eq.s32.totalorder %s29, 1
      %p129 = por %p127, %p128
      %p130 = scmp.ne.s32.totalorder %s121, %s122
      %p131 = scmp.eq.s32.totalorder %s29, 0
      %p132 = por %p130, %p131
      %p133 = scmp.ne.s32.totalorder %s121, %s122
      %p134 = scmp.eq.s32.totalorder %s30, 1
      %p135 = por %p133, %p134
      %p137 = scmp.ne.s32.totalorder %s122, %s136
      %p138 = scmp.eq.s32.totalorder %s30, 0
      %p139 = por %p137, %p138
      %s141 = sadd.s32 %s140, 1
      %p144 = scmp.eq.s32.totalorder %s24, 1
      %p145 = scmp.ne.s32.totalorder %s140, %s142
      %p146 = scmp.eq.s32.totalorder %s24, 0
      %p147 = por %p145, %p146
      %p148 = scmp.ne.s32.totalorder %s140, %s142
      %p149 = scmp.eq.s32.totalorder %s29, 1
      %p150 = por %p148, %p149
      %p151 = scmp.ne.s32.totalorder %s142, %s143
      %p152 = scmp.eq.s32.totalorder %s29, 0
      %p153 = por %p151, %p152
      %p154 = scmp.ne.s32.totalorder %s142, %s143
      %p155 = scmp.eq.s32.totalorder %s30, 1
      %p156 = por %p154, %p155
      %p158 = scmp.ne.s32.totalorder %s143, %s157
      %p159 = scmp.eq.s32.totalorder %s30, 0
      %p160 = por %p158, %p159
      %s162 = sadd.s32 %s161, 1
      %p165 = scmp.eq.s32.totalorder %s24, 1
      %p166 = scmp.ne.s32.totalorder %s161, %s163
      %p167 = scmp.eq.s32.totalorder %s24, 0
      %p168 = por %p166, %p167
      %p169 = scmp.ne.s32.totalorder %s161, %s163
      %p170 = scmp.eq.s32.totalorder %s29, 1
      %p171 = por %p169, %p170
      %p172 = scmp.ne.s32.totalorder %s163, %s164
      %p173 = scmp.eq.s32.totalorder %s29, 0
      %p174 = por %p172, %p173
      %p175 = scmp.ne.s32.totalorder %s163, %s164
      %p176 = scmp.eq.s32.totalorder %s30, 1
      %p177 = por %p175, %p176
      %p179 = scmp.ne.s32.totalorder %s164, %s178
      %p180 = scmp.eq.s32.totalorder %s30, 0
      %p181 = por %p179, %p180
      %s183 = sadd.s32 %s182, 1
      %p186 = scmp.eq.s32.totalorder %s24, 1
      %p187 = scmp.ne.s32.totalorder %s182, %s184
      %p188 = scmp.eq.s32.totalorder %s24, 0
      %p189 = por %p187, %p188
      %p190 = scmp.ne.s32.totalorder %s182, %s184
      %p191 = scmp.eq.s32.totalorder %s29, 1
      %p192 = por %p190, %p191
      %p193 = scmp.ne.s32.totalorder %s184, %s185
      %p194 = scmp.eq.s32.totalorder %s29, 0
      %p195 = por %p193, %p194
      %p196 = scmp.ne.s32.totalorder %s184, %s185
      %p197 = scmp.eq.s32.totalorder %s30, 1
      %p198 = por %p196, %p197
      %p200 = scmp.ne.s32.totalorder %s185, %s199
      %p201 = scmp.eq.s32.totalorder %s30, 0
      %p202 = por %p200, %p201
      %s203 = ssub.s32 %s31, %s43
      %s204 = ssub.s32 %s32, %s39
      %s205 = sor.u32 %s203, %s204
      %p206 = scmp.eq.s32.totalorder %s205, 0
      %s208 = sadd.s32 %s207, 1
      %s209 = scalar_select %p206, %s207, %s208
      %p212 = pneg %p206
      %p213 = scmp.eq.s32.totalorder %s24, 1
      %p214 = por %p212, %p213
      %p215 = scmp.ne.s32.totalorder %s207, %s210
      %p216 = scmp.eq.s32.totalorder %s24, 0
      %p217 = por %p215, %p216
      %p218 = scmp.ne.s32.totalorder %s207, %s210
      %p219 = scmp.eq.s32.totalorder %s29, 1
      %p220 = por %p218, %p219
      %p221 = scmp.ne.s32.totalorder %s210, %s211
      %p222 = scmp.eq.s32.totalorder %s29, 0
      %p223 = por %p221, %p222
      %p224 = scmp.ne.s32.totalorder %s210, %s211
      %p225 = scmp.eq.s32.totalorder %s30, 1
      %p226 = por %p224, %p225
      %p228 = scmp.ne.s32.totalorder %s211, %s227
      %p229 = scmp.eq.s32.totalorder %s30, 0
      %p230 = por %p228, %p229
      %p231 = scmp.le.s32.totalorder 1, %s24
      %p232 = scmp.lt.s32.totalorder %s24, 3
      %p233 = pnand %p231, %p232
      %p234 = pneg %p233
      // Predicated region
      $region9: #{tpu_custom_call.1} parent=5 // pred_check
        _
      $region10: #{tpu_custom_call.1} parent=5 // pred_check_branch
        %236 = sbr.rel (%p233) target = $region12
      $region11: #{tpu_custom_call.1} parent=5 // pred_region
        %s237 = ssub.s32 %s24, 1
        // Predicated region
        $region13: #{tpu_custom_call.1} parent=11 // pred_check
          %p238 = pneg %p111
        $region14: #{tpu_custom_call.1} parent=11 // pred_check_branch
          %240 = sbr.rel (%p238) target = $region16
        $region15: #{tpu_custom_call.1} parent=11 // pred_region
          %s242 = ssub.s32 256, 256
          %243 = vsyncadd [#allocation6], %s242
          %s244 = sshll.u32 [#allocation7], 4
          %s245 = int_to_ptr.vmem [resolvable:$true] %s244
          %250 = dma.hbm_to_vmem [thread:$0]  %s2, 256, %s245, [#allocation6], 64, 64, 4
        $region16: #{tpu_custom_call.1} parent=11 // pred_fallthru
          _
        // Predicated region
        $region17: #{tpu_custom_call.1} parent=11 // pred_check
          %p251 = pneg %p132
        $region18: #{tpu_custom_call.1} parent=11 // pred_check_branch
          %253 = sbr.rel (%p251) target = $region20
        $region19: #{tpu_custom_call.1} parent=11 // pred_region
          %s255 = ssub.s32 384, 384
          %256 = vsyncadd [#allocation9], %s255
          %s257 = sshll.u32 [#allocation8], 4
          %s258 = int_to_ptr.vmem [resolvable:$true] %s257
          %263 = dma.hbm_to_vmem [thread:$0]  %s3, 384, %s258, [#allocation9], 64, 64, 4
        $region20: #{tpu_custom_call.1} parent=11 // pred_fallthru
          _
        // Predicated region
        $region21: #{tpu_custom_call.1} parent=11 // pred_check
          %p264 = pneg %p153
        $region22: #{tpu_custom_call.1} parent=11 // pred_check_branch
          %266 = sbr.rel (%p264) target = $region24
        $region23: #{tpu_custom_call.1} parent=11 // pred_region
          %s268 = ssub.s32 384, 384
          %269 = vsyncadd [#allocation9], %s268
          %s270 = sshll.u32 [#allocation10], 4
          %s271 = int_to_ptr.vmem [resolvable:$true] %s270
          %276 = dma.hbm_to_vmem [thread:$0]  %s4, 384, %s271, [#allocation9], 64, 64, 4
        $region24: #{tpu_custom_call.1} parent=11 // pred_fallthru
          _
        // Predicated region
        $region25: #{tpu_custom_call.1} parent=11 // pred_check
          %p277 = pneg %p174
        $region26: #{tpu_custom_call.1} parent=11 // pred_check_branch
          %279 = sbr.rel (%p277) target = $region28
        $region27: #{tpu_custom_call.1} parent=11 // pred_region
          %s281 = ssub.s32 1024, 1024
          %282 = vsyncadd [#allocation12], %s281
          %s283 = sshll.u32 [#allocation11], 4
          %s284 = int_to_ptr.vmem [resolvable:$true] %s283
          %289 = dma.hbm_to_vmem [thread:$0]  %s5, 1024, %s284, [#allocation12], 64, 64, 4
        $region28: #{tpu_custom_call.1} parent=11 // pred_fallthru
          _
        // Predicated region
        $region29: #{tpu_custom_call.1} parent=11 // pred_check
          %p290 = pneg %p195
        $region30: #{tpu_custom_call.1} parent=11 // pred_check_branch
          %292 = sbr.rel (%p290) target = $region32
        $region31: #{tpu_custom_call.1} parent=11 // pred_region
          _
        $region32: #{tpu_custom_call.1} parent=11 // pred_fallthru
          _
      $region12: #{tpu_custom_call.1} parent=5 // pred_fallthru
        _
      %p293 = scmp.lt.s32.totalorder %s24, 2
      // Predicated region
      $region33: #{tpu_custom_call.1} parent=5 // pred_check
        %p294 = pneg %p293
      $region34: #{tpu_custom_call.1} parent=5 // pred_check_branch
        %296 = sbr.rel (%p294) target = $region36
      $region35: #{tpu_custom_call.1} parent=5 // pred_region
        // Predicated region
        $region37: #{tpu_custom_call.1} parent=35 // pred_check
          %p297 = pneg %p58
        $region38: #{tpu_custom_call.1} parent=35 // pred_check_branch
          %299 = sbr.rel (%p297) target = $region40
        $region39: #{tpu_custom_call.1} parent=35 // pred_region
          %s300 = sand.u32 %s48, 1
          %s301 = scalar_lea.sflag [#allocation3], %s300
          %s302 = sand.u32 %s48, 1
          %s303 = smul.addr %s302, 8
          %s304 = scalar_lea.vmem [#allocation2], %s303
          %s306 = ssub.s32 128, 128
          %307 = vsyncadd %s301, %s306
          %s308 = sadd.s32 %s32, %s31
          %s309 = smul.addr %s308, 128
          %s310 = scalar_lea.hbm %s0, %s309
          %s312 = sshll.u32 %s304, 4
          %s313 = int_to_ptr.vmem [resolvable:$true] %s312
          %315 = dma.hbm_to_vmem [thread:$0]  %s310, 128, %s313, %s301
        $region40: #{tpu_custom_call.1} parent=35 // pred_fallthru
          _
        // Predicated region
        $region41: #{tpu_custom_call.1} parent=35 // pred_check
          %p316 = pneg %p84
        $region42: #{tpu_custom_call.1} parent=35 // pred_check_branch
          %318 = sbr.rel (%p316) target = $region44
        $region43: #{tpu_custom_call.1} parent=35 // pred_region
          %s319 = sand.u32 %s24, 1
          %s320 = scalar_lea.sflag [#allocation6], %s319
          %s321 = sand.u32 %s74, 1
          %s322 = smul.addr %s321, 8
          %s323 = scalar_lea.vmem [#allocation5], %s322
          %s325 = ssub.s32 128, 128
          %326 = vsyncadd %s320, %s325
          %s327 = smul.addr %s31, 128
          %s328 = scalar_lea.hbm %s1, %s327
          %s330 = sshll.u32 %s323, 4
          %s331 = int_to_ptr.vmem [resolvable:$true] %s330
          %333 = dma.hbm_to_vmem [thread:$0]  %s328, 128, %s331, %s320
        $region44: #{tpu_custom_call.1} parent=35 // pred_fallthru
          _
      $region36: #{tpu_custom_call.1} parent=5 // pred_fallthru
        _
      %p334 = scmp.le.s32.totalorder 1, %s24
      %p335 = scmp.lt.s32.totalorder %s24, 3
      %p336 = pnand %p334, %p335
      %p337 = pneg %p336
      // Predicated region
      $region45: #{tpu_custom_call.1} parent=5 // pred_check
        _
      $region46: #{tpu_custom_call.1} parent=5 // pred_check_branch
        %339 = sbr.rel (%p336) target = $region48
      $region47: #{tpu_custom_call.1} parent=5 // pred_region
        %s340 = ssub.s32 %s24, 1
        %s341 = sand.u32 %s51, 1
        %s342 = scalar_lea.sflag [#allocation3], %s341
        %s343 = sand.u32 %s51, 1
        %s344 = smul.addr %s343, 8
        %s345 = scalar_lea.vmem [#allocation2], %s344
        // Predicated region
        $region49: #{tpu_custom_call.1} parent=47 // pred_check
          %p346 = pneg %p64
        $region50: #{tpu_custom_call.1} parent=47 // pred_check_branch
          %348 = sbr.rel (%p346) target = $region52
        $region51: #{tpu_custom_call.1} parent=47 // pred_region
          %349 = dma.done %s342, 128
        $region52: #{tpu_custom_call.1} parent=47 // pred_fallthru
          _
        %s350 = sand.u32 %s29, 1
        %s351 = scalar_lea.sflag [#allocation6], %s350
        %s352 = sand.u32 %s77, 1
        %s353 = smul.addr %s352, 8
        %s354 = scalar_lea.vmem [#allocation5], %s353
        // Predicated region
        $region53: #{tpu_custom_call.1} parent=47 // pred_check
          %p355 = pneg %p90
        $region54: #{tpu_custom_call.1} parent=47 // pred_check_branch
          %357 = sbr.rel (%p355) target = $region56
        $region55: #{tpu_custom_call.1} parent=47 // pred_region
          %358 = dma.done %s351, 128
        $region56: #{tpu_custom_call.1} parent=47 // pred_fallthru
          _
        // Predicated region
        $region57: #{tpu_custom_call.1} parent=47 // pred_check
          %p359 = pneg %p111
        $region58: #{tpu_custom_call.1} parent=47 // pred_check_branch
          %361 = sbr.rel (%p359) target = $region60
        $region59: #{tpu_custom_call.1} parent=47 // pred_region
          %362 = dma.done [#allocation6], 256
        $region60: #{tpu_custom_call.1} parent=47 // pred_fallthru
          _
        // Predicated region
        $region61: #{tpu_custom_call.1} parent=47 // pred_check
          %p363 = pneg %p132
        $region62: #{tpu_custom_call.1} parent=47 // pred_check_branch
          %365 = sbr.rel (%p363) target = $region64
        $region63: #{tpu_custom_call.1} parent=47 // pred_region
          %366 = dma.done [#allocation9], 384
        $region64: #{tpu_custom_call.1} parent=47 // pred_fallthru
          _
        // Predicated region
        $region65: #{tpu_custom_call.1} parent=47 // pred_check
          %p367 = pneg %p153
        $region66: #{tpu_custom_call.1} parent=47 // pred_check_branch
          %369 = sbr.rel (%p367) target = $region68
        $region67: #{tpu_custom_call.1} parent=47 // pred_region
          %370 = dma.done [#allocation9], 384
        $region68: #{tpu_custom_call.1} parent=47 // pred_fallthru
          _
        // Predicated region
        $region69: #{tpu_custom_call.1} parent=47 // pred_check
          %p371 = pneg %p174
        $region70: #{tpu_custom_call.1} parent=47 // pred_check_branch
          %373 = sbr.rel (%p371) target = $region72
        $region71: #{tpu_custom_call.1} parent=47 // pred_region
          %374 = dma.done [#allocation12], 1024
        $region72: #{tpu_custom_call.1} parent=47 // pred_fallthru
          _
        %s375 = sand.u32 %s51, 1
        %s376 = scalar_lea.sflag [#allocation3], %s375
        %s377 = sand.u32 %s51, 1
        %s378 = smul.addr %s377, 8
        %s379 = scalar_lea.vmem [#allocation2], %s378
        %p380 = pneg %p64
        %p381 = pneg %p61
        %s382 = sand.u32 %s29, 1
        %s383 = scalar_lea.sflag [#allocation6], %s382
        %s384 = sand.u32 %s77, 1
        %s385 = smul.addr %s384, 8
        %s386 = scalar_lea.vmem [#allocation5], %s385
        %p387 = pneg %p90
        %p388 = pneg %p87
        %p389 = pneg %p111
        %p390 = pneg %p108
        %p391 = pneg %p132
        %p392 = pneg %p129
        %p393 = pneg %p153
        %p394 = pneg %p150
        %p395 = pneg %p174
        %p396 = pneg %p171
        %p397 = pneg %p195
        %p398 = pneg %p192
        %p399 = pneg %p223
        %p400 = pneg %p220
        %s401 = sand.u32 %s210, 1
        %s402 = scalar_lea.sflag [#allocation4], %s401
        %s403 = sand.u32 %s210, 1
        %s404 = smul.addr %s403, 8
        %s405 = scalar_lea.vmem [#allocation13], %s404
        %v407 = vld [vmem:[%s345] sm:$0xff]
        %v408 = vpack.c.bf16 %v407, %v407
        %v409 = vld [vmem:[%s354] sm:$0xff]
        %v410 = vpack.c.bf16 %v409, %v409
        %v411 = vld [vmem:[#allocation7] sm:$0xf]
        %v412 = vld [vmem:[#allocation7 + $0x4] sm:$0xf]
        %v413 = vld [vmem:[#allocation7 + $0x8] sm:$0xf]
        %v414 = vld [vmem:[#allocation7 + $0xc] sm:$0xf]
        %v419 = vunpack.c.l.b16 %v411
        %v420 = vunpack.c.l.b16 %v412
        %v421 = vunpack.c.l.b16 %v413
        %v422 = vunpack.c.l.b16 %v414
        %v423 = vpack.c.b16 %v420, %v419
        %v424 = vpack.c.b16 %v422, %v421
        %vm427 = vcmask 261120
        %v429 = vsel %vm427, %v408, 0
        %431 = vmatprep.subr.bf16.mxu0 0
        %432 = vmatpush1.bf16.msra.mxu0 %v423
        %433 = vmatprep.subr.bf16.mxu0 0
        %434 = vmatpush1.bf16.msra.mxu0 %v424
        %435 = vmatprep.subr.bf16.mxu0 0
        %436 = vmatpush1.bf16.msra.mxu0 0
        %437 = vmatprep.subr.bf16.mxu0 0
        %438 = vmatpush1.bf16.msra.mxu0 0
        %439 = vmatprep.subr.bf16.mxu0 0
        %440 = vmatpush1.bf16.msra.mxu0 0
        %441 = vmatprep.subr.bf16.mxu0 0
        %442 = vmatpush1.bf16.msra.mxu0 0
        %443 = vmatprep.subr.bf16.mxu0 0
        %444 = vmatpush1.bf16.msra.mxu0 0
        %445 = vmatprep.subr.bf16.mxu0 0
        %446 = vmatpush1.bf16.msra.mxu0 0
        %447 = vmatprep.subr.bf16.mxu0 0
        %448 = vmatpush1.bf16.msra.mxu0 0
        %449 = vmatprep.subr.bf16.mxu0 0
        %450 = vmatpush1.bf16.msra.mxu0 0
        %451 = vmatprep.subr.bf16.mxu0 0
        %452 = vmatpush1.bf16.msra.mxu0 0
        %453 = vmatprep.subr.bf16.mxu0 0
        %454 = vmatpush1.bf16.msra.mxu0 0
        %455 = vmatprep.subr.bf16.mxu0 0
        %456 = vmatpush1.bf16.msra.mxu0 0
        %457 = vmatprep.subr.bf16.mxu0 0
        %458 = vmatpush1.bf16.msra.mxu0 0
        %459 = vmatprep.subr.bf16.mxu0 0
        %460 = vmatpush1.bf16.msra.mxu0 0
        %461 = vmatprep.subr.bf16.mxu0 0
        %462 = vmatpush1.bf16.msra.mxu0 0
        %463 = vmatprep.mubr.bf16.mxu0 0
        %464 = vmatmul.mubr.bf16.gmra.mrb[0].mxu0 %v429
        %v465 = vpop.f32.mrb[0].mxu0
        %v466 = vadd.f32 0.0, %v465
        %v467 = vpop.f32.mrb[0].mxu0
        %v468 = vpop.f32.mrb[0].mxu0
        %v469 = vpop.f32.mrb[0].mxu0
        %470 = vdwg.mxu0
        %v471 = vld [vmem:[#allocation8] sm:$0xf]
        %v472 = vld [vmem:[#allocation8 + $0x4] sm:$0xf]
        %v473 = vld [vmem:[#allocation8 + $0x8] sm:$0xf]
        %v474 = vld [vmem:[#allocation8 + $0xc] sm:$0xf]
        %v475 = vld [vmem:[#allocation8 + $0x10] sm:$0xf]
        %v476 = vld [vmem:[#allocation8 + $0x14] sm:$0xf]
        %v483 = vunpack.c.l.b16 %v471
        %v484 = vunpack.c.l.b16 %v472
        %v485 = vunpack.c.l.b16 %v473
        %v486 = vunpack.c.l.b16 %v474
        %v487 = vunpack.c.l.b16 %v475
        %v488 = vunpack.c.l.b16 %v476
        %v489 = vpack.c.b16 %v484, %v483
        %v490 = vpack.c.b16 %v486, %v485
        %v491 = vpack.c.b16 %v488, %v487
        %vm495 = vcmask 392192
        %v497 = vsel %vm495, %v410, 0
        %499 = vmatprep.subr.bf16.mxu0 0
        %500 = vmatpush1.bf16.msra.mxu0 %v489
        %501 = vmatprep.subr.bf16.mxu0 0
        %502 = vmatpush1.bf16.msra.mxu0 %v490
        %503 = vmatprep.subr.bf16.mxu0 0
        %504 = vmatpush1.bf16.msra.mxu0 %v491
        %505 = vmatprep.subr.bf16.mxu0 0
        %506 = vmatpush1.bf16.msra.mxu0 0
        %507 = vmatprep.subr.bf16.mxu0 0
        %508 = vmatpush1.bf16.msra.mxu0 0
        %509 = vmatprep.subr.bf16.mxu0 0
        %510 = vmatpush1.bf16.msra.mxu0 0
        %511 = vmatprep.subr.bf16.mxu0 0
        %512 = vmatpush1.bf16.msra.mxu0 0
        %513 = vmatprep.subr.bf16.mxu0 0
        %514 = vmatpush1.bf16.msra.mxu0 0
        %515 = vmatprep.subr.bf16.mxu0 0
        %516 = vmatpush1.bf16.msra.mxu0 0
        %517 = vmatprep.subr.bf16.mxu0 0
        %518 = vmatpush1.bf16.msra.mxu0 0
        %519 = vmatprep.subr.bf16.mxu0 0
        %520 = vmatpush1.bf16.msra.mxu0 0
        %521 = vmatprep.subr.bf16.mxu0 0
        %522 = vmatpush1.bf16.msra.mxu0 0
        %523 = vmatprep.subr.bf16.mxu0 0
        %524 = vmatpush1.bf16.msra.mxu0 0
        %525 = vmatprep.subr.bf16.mxu0 0
        %526 = vmatpush1.bf16.msra.mxu0 0
        %527 = vmatprep.subr.bf16.mxu0 0
        %528 = vmatpush1.bf16.msra.mxu0 0
        %529 = vmatprep.subr.bf16.mxu0 0
        %530 = vmatpush1.bf16.msra.mxu0 0
        %531 = vmatprep.mubr.bf16.mxu0 0
        %532 = vmatmul.mubr.bf16.gmra.mrb[0].mxu0 %v497
        %v533 = vpop.f32.mrb[0].mxu0
        %v534 = vadd.f32 0.0, %v533
        %v535 = vpop.f32.mrb[0].mxu0
        %v536 = vpop.f32.mrb[0].mxu0
        %v537 = vpop.f32.mrb[0].mxu0
        %538 = vdwg.mxu0
        %v539 = vld [vmem:[#allocation10] sm:$0xf]
        %v540 = vld [vmem:[#allocation10 + $0x4] sm:$0xf]
        %v541 = vld [vmem:[#allocation10 + $0x8] sm:$0xf]
        %v542 = vld [vmem:[#allocation10 + $0xc] sm:$0xf]
        %v543 = vld [vmem:[#allocation10 + $0x10] sm:$0xf]
        %v544 = vld [vmem:[#allocation10 + $0x14] sm:$0xf]
        %v551 = vunpack.c.l.b16 %v539
        %v552 = vunpack.c.l.b16 %v540
        %v553 = vunpack.c.l.b16 %v541
        %v554 = vunpack.c.l.b16 %v542
        %v555 = vunpack.c.l.b16 %v543
        %v556 = vunpack.c.l.b16 %v544
        %v557 = vpack.c.b16 %v552, %v551
        %v558 = vpack.c.b16 %v554, %v553
        %v559 = vpack.c.b16 %v556, %v555
        %563 = vmatprep.subr.bf16.mxu0 0
        %564 = vmatpush1.bf16.msra.mxu0 %v557
        %565 = vmatprep.subr.bf16.mxu0 0
        %566 = vmatpush1.bf16.msra.mxu0 %v558
        %567 = vmatprep.subr.bf16.mxu0 0
        %568 = vmatpush1.bf16.msra.mxu0 %v559
        %569 = vmatprep.subr.bf16.mxu0 0
        %570 = vmatpush1.bf16.msra.mxu0 0
        %571 = vmatprep.subr.bf16.mxu0 0
        %572 = vmatpush1.bf16.msra.mxu0 0
        %573 = vmatprep.subr.bf16.mxu0 0
        %574 = vmatpush1.bf16.msra.mxu0 0
        %575 = vmatprep.subr.bf16.mxu0 0
        %576 = vmatpush1.bf16.msra.mxu0 0
        %577 = vmatprep.subr.bf16.mxu0 0
        %578 = vmatpush1.bf16.msra.mxu0 0
        %579 = vmatprep.subr.bf16.mxu0 0
        %580 = vmatpush1.bf16.msra.mxu0 0
        %581 = vmatprep.subr.bf16.mxu0 0
        %582 = vmatpush1.bf16.msra.mxu0 0
        %583 = vmatprep.subr.bf16.mxu0 0
        %584 = vmatpush1.bf16.msra.mxu0 0
        %585 = vmatprep.subr.bf16.mxu0 0
        %586 = vmatpush1.bf16.msra.mxu0 0
        %587 = vmatprep.subr.bf16.mxu0 0
        %588 = vmatpush1.bf16.msra.mxu0 0
        %589 = vmatprep.subr.bf16.mxu0 0
        %590 = vmatpush1.bf16.msra.mxu0 0
        %591 = vmatprep.subr.bf16.mxu0 0
        %592 = vmatpush1.bf16.msra.mxu0 0
        %593 = vmatprep.subr.bf16.mxu0 0
        %594 = vmatpush1.bf16.msra.mxu0 0
        %595 = vmatprep.mubr.bf16.mxu0 0
        %596 = vmatmul.mubr.bf16.gmra.mrb[0].mxu0 %v497
        %v597 = vpop.f32.mrb[0].mxu0
        %v598 = vadd.f32 0.0, %v597
        %v599 = vpop.f32.mrb[0].mxu0
        %v600 = vpop.f32.mrb[0].mxu0
        %v601 = vpop.f32.mrb[0].mxu0
        %602 = vdwg.mxu0
        %v603 = vpack.c.bf16 %v466, %v466
        %v604 = vpack.c.bf16 %v534, %v534
        %v605 = vpack.c.bf16 %v598, %v598
        %vm606 = vcmask 523264
        %v608 = vsel %vm606, %v603, 0
        %v611 = vsel %vm606, %v604, 0
        %613 = vmatprep.subr.bf16.mxu0 0
        %614 = vmatpush1.bf16.xpose.msra.mxu0 %v611
        %615 = vmatprep.subr.bf16.mxu0 0
        %616 = vmatpush1.bf16.xpose.msra.mxu0 0
        %617 = vmatprep.subr.bf16.mxu0 0
        %618 = vmatpush1.bf16.xpose.msra.mxu0 0
        %619 = vmatprep.subr.bf16.mxu0 0
        %620 = vmatpush1.bf16.xpose.msra.mxu0 0
        %621 = vmatprep.subr.bf16.mxu0 0
        %622 = vmatpush1.bf16.xpose.msra.mxu0 0
        %623 = vmatprep.subr.bf16.mxu0 0
        %624 = vmatpush1.bf16.xpose.msra.mxu0 0
        %625 = vmatprep.subr.bf16.mxu0 0
        %626 = vmatpush1.bf16.xpose.msra.mxu0 0
        %627 = vmatprep.subr.bf16.mxu0 0
        %628 = vmatpush1.bf16.xpose.msra.mxu0 0
        %629 = vmatprep.subr.bf16.mxu0 0
        %630 = vmatpush1.bf16.xpose.msra.mxu0 0
        %631 = vmatprep.subr.bf16.mxu0 0
        %632 = vmatpush1.bf16.xpose.msra.mxu0 0
        %633 = vmatprep.subr.bf16.mxu0 0
        %634 = vmatpush1.bf16.xpose.msra.mxu0 0
        %635 = vmatprep.subr.bf16.mxu0 0
        %636 = vmatpush1.bf16.xpose.msra.mxu0 0
        %637 = vmatprep.subr.bf16.mxu0 0
        %638 = vmatpush1.bf16.xpose.msra.mxu0 0
        %639 = vmatprep.subr.bf16.mxu0 0
        %640 = vmatpush1.bf16.xpose.msra.mxu0 0
        %641 = vmatprep.subr.bf16.mxu0 0
        %642 = vmatpush1.bf16.xpose.msra.mxu0 0
        %643 = vmatprep.subr.bf16.mxu0 0
        %644 = vmatpush1.bf16.xpose.msra.mxu0 0
        %645 = vmatprep.mubr.bf16.mxu0 0
        %646 = vmatmul.mubr.bf16.gmra.mrb[0].mxu0 %v608
        %v647 = vpop.f32.mrb[0].mxu0
        %v648 = vadd.f32 0.0, %v647
        %v649 = vpop.f32.mrb[0].mxu0
        %v650 = vpop.f32.mrb[0].mxu0
        %v651 = vpop.f32.mrb[0].mxu0
        %652 = vdwg.mxu0
        %vm653 = vcmask 64512
        %v654 = vsel %vm653, %v648, -inf
        %655 = vmax.xlane.f32.xlu0 %v654
        %v656 = vpop.xlane.xlu0 %655
        %v657 = vsub.f32 %v648, %v656
        %v658 = vmul.f32 %v657, 1.442695
        %v659 = vpow.pop %v658
        %v660 = vsel %vm653, %v659, 0.0
        %661 = vadd.xlane.f32.xlu0 %v660
        %v662 = vpop.xlane.xlu0 %661
        %v663 = vrcp.pop %v662
        %v664 = vpack.c.bf16 %v659, %v659
        %v666 = vsel %vm653, %v664, 0
        %vm668 = vcmask 1043456
        %v670 = vsel %vm668, %v605, 0
        %672 = vmatprep.subr.bf16.mxu0 0
        %673 = vmatpush1.bf16.msra.mxu0 %v670
        %674 = vmatprep.subr.bf16.mxu0 0
        %675 = vmatpush1.bf16.msra.mxu0 0
        %676 = vmatprep.subr.bf16.mxu0 0
        %677 = vmatpush1.bf16.msra.mxu0 0
        %678 = vmatprep.subr.bf16.mxu0 0
        %679 = vmatpush1.bf16.msra.mxu0 0
        %680 = vmatprep.subr.bf16.mxu0 0
        %681 = vmatpush1.bf16.msra.mxu0 0
        %682 = vmatprep.subr.bf16.mxu0 0
        %683 = vmatpush1.bf16.msra.mxu0 0
        %684 = vmatprep.subr.bf16.mxu0 0
        %685 = vmatpush1.bf16.msra.mxu0 0
        %686 = vmatprep.subr.bf16.mxu0 0
        %687 = vmatpush1.bf16.msra.mxu0 0
        %688 = vmatprep.subr.bf16.mxu0 0
        %689 = vmatpush1.bf16.msra.mxu0 0
        %690 = vmatprep.subr.bf16.mxu0 0
        %691 = vmatpush1.bf16.msra.mxu0 0
        %692 = vmatprep.subr.bf16.mxu0 0
        %693 = vmatpush1.bf16.msra.mxu0 0
        %694 = vmatprep.subr.bf16.mxu0 0
        %695 = vmatpush1.bf16.msra.mxu0 0
        %696 = vmatprep.subr.bf16.mxu0 0
        %697 = vmatpush1.bf16.msra.mxu0 0
        %698 = vmatprep.subr.bf16.mxu0 0
        %699 = vmatpush1.bf16.msra.mxu0 0
        %700 = vmatprep.subr.bf16.mxu0 0
        %701 = vmatpush1.bf16.msra.mxu0 0
        %702 = vmatprep.subr.bf16.mxu0 0
        %703 = vmatpush1.bf16.msra.mxu0 0
        %704 = vmatprep.mubr.bf16.mxu0 0
        %705 = vmatmul.mubr.bf16.gmra.mrb[0].mxu0 %v666
        %v706 = vpop.f32.mrb[0].mxu0
        %v707 = vadd.f32 0.0, %v706
        %v708 = vpop.f32.mrb[0].mxu0
        %v709 = vpop.f32.mrb[0].mxu0
        %v710 = vpop.f32.mrb[0].mxu0
        %711 = vdwg.mxu0
        %v712 = vmul.f32 %v707, %v663
        %v713 = vpack.c.bf16 %v712, %v712
        %715 = vrot.lane.b32.xlu0 %v603, 64
        %v716 = vpop.permute.xlu0 %715
        %718 = vrot.lane.b32.xlu0 %v604, 64
        %v719 = vpop.permute.xlu0 %718
        %v721 = vsel %vm606, %v716, 0
        %v724 = vsel %vm606, %v719, 0
        %726 = vmatprep.subr.bf16.mxu0 0
        %727 = vmatpush1.bf16.xpose.msra.mxu0 %v724
        %728 = vmatprep.subr.bf16.mxu0 0
        %729 = vmatpush1.bf16.xpose.msra.mxu0 0
        %730 = vmatprep.subr.bf16.mxu0 0
        %731 = vmatpush1.bf16.xpose.msra.mxu0 0
        %732 = vmatprep.subr.bf16.mxu0 0
        %733 = vmatpush1.bf16.xpose.msra.mxu0 0
        %734 = vmatprep.subr.bf16.mxu0 0
        %735 = vmatpush1.bf16.xpose.msra.mxu0 0
        %736 = vmatprep.subr.bf16.mxu0 0
        %737 = vmatpush1.bf16.xpose.msra.mxu0 0
        %738 = vmatprep.subr.bf16.mxu0 0
        %739 = vmatpush1.bf16.xpose.msra.mxu0 0
        %740 = vmatprep.subr.bf16.mxu0 0
        %741 = vmatpush1.bf16.xpose.msra.mxu0 0
        %742 = vmatprep.subr.bf16.mxu0 0
        %743 = vmatpush1.bf16.xpose.msra.mxu0 0
        %744 = vmatprep.subr.bf16.mxu0 0
        %745 = vmatpush1.bf16.xpose.msra.mxu0 0
        %746 = vmatprep.subr.bf16.mxu0 0
        %747 = vmatpush1.bf16.xpose.msra.mxu0 0
        %748 = vmatprep.subr.bf16.mxu0 0
        %749 = vmatpush1.bf16.xpose.msra.mxu0 0
        %750 = vmatprep.subr.bf16.mxu0 0
        %751 = vmatpush1.bf16.xpose.msra.mxu0 0
        %752 = vmatprep.subr.bf16.mxu0 0
        %753 = vmatpush1.bf16.xpose.msra.mxu0 0
        %754 = vmatprep.subr.bf16.mxu0 0
        %755 = vmatpush1.bf16.xpose.msra.mxu0 0
        %756 = vmatprep.subr.bf16.mxu0 0
        %757 = vmatpush1.bf16.xpose.msra.mxu0 0
        %758 = vmatprep.mubr.bf16.mxu0 0
        %759 = vmatmul.mubr.bf16.gmra.mrb[0].mxu0 %v721
        %v760 = vpop.f32.mrb[0].mxu0
        %v761 = vadd.f32 0.0, %v760
        %v762 = vpop.f32.mrb[0].mxu0
        %v763 = vpop.f32.mrb[0].mxu0
        %v764 = vpop.f32.mrb[0].mxu0
        %765 = vdwg.mxu0
        %v766 = vsel %vm653, %v761, -inf
        %767 = vmax.xlane.f32.xlu0 %v766
        %v768 = vpop.xlane.xlu0 %767
        %v769 = vsub.f32 %v761, %v768
        %v770 = vmul.f32 %v769, 1.442695
        %v771 = vpow.pop %v770
        %v772 = vsel %vm653, %v771, 0.0
        %773 = vadd.xlane.f32.xlu0 %v772
        %v774 = vpop.xlane.xlu0 %773
        %v775 = vrcp.pop %v774
        %v776 = vpack.c.bf16 %v771, %v771
        %778 = vrot.lane.b32.xlu0 %v605, 64
        %v779 = vpop.permute.xlu0 %778
        %v781 = vsel %vm653, %v776, 0
        %v784 = vsel %vm668, %v779, 0
        %786 = vmatprep.subr.bf16.mxu0 0
        %787 = vmatpush1.bf16.msra.mxu0 %v784
        %788 = vmatprep.subr.bf16.mxu0 0
        %789 = vmatpush1.bf16.msra.mxu0 0
        %790 = vmatprep.subr.bf16.mxu0 0
        %791 = vmatpush1.bf16.msra.mxu0 0
        %792 = vmatprep.subr.bf16.mxu0 0
        %793 = vmatpush1.bf16.msra.mxu0 0
        %794 = vmatprep.subr.bf16.mxu0 0
        %795 = vmatpush1.bf16.msra.mxu0 0
        %796 = vmatprep.subr.bf16.mxu0 0
        %797 = vmatpush1.bf16.msra.mxu0 0
        %798 = vmatprep.subr.bf16.mxu0 0
        %799 = vmatpush1.bf16.msra.mxu0 0
        %800 = vmatprep.subr.bf16.mxu0 0
        %801 = vmatpush1.bf16.msra.mxu0 0
        %802 = vmatprep.subr.bf16.mxu0 0
        %803 = vmatpush1.bf16.msra.mxu0 0
        %804 = vmatprep.subr.bf16.mxu0 0
        %805 = vmatpush1.bf16.msra.mxu0 0
        %806 = vmatprep.subr.bf16.mxu0 0
        %807 = vmatpush1.bf16.msra.mxu0 0
        %808 = vmatprep.subr.bf16.mxu0 0
        %809 = vmatpush1.bf16.msra.mxu0 0
        %810 = vmatprep.subr.bf16.mxu0 0
        %811 = vmatpush1.bf16.msra.mxu0 0
        %812 = vmatprep.subr.bf16.mxu0 0
        %813 = vmatpush1.bf16.msra.mxu0 0
        %814 = vmatprep.subr.bf16.mxu0 0
        %815 = vmatpush1.bf16.msra.mxu0 0
        %816 = vmatprep.subr.bf16.mxu0 0
        %817 = vmatpush1.bf16.msra.mxu0 0
        %818 = vmatprep.mubr.bf16.mxu0 0
        %819 = vmatmul.mubr.bf16.gmra.mrb[0].mxu0 %v781
        %v820 = vpop.f32.mrb[0].mxu0
        %v821 = vadd.f32 0.0, %v820
        %v822 = vpop.f32.mrb[0].mxu0
        %v823 = vpop.f32.mrb[0].mxu0
        %v824 = vpop.f32.mrb[0].mxu0
        %825 = vdwg.mxu0
        %v826 = vmul.f32 %v821, %v775
        %v827 = vpack.c.bf16 %v826, %v826
        %829 = vrot.lane.b32.xlu0 %v827, 64
        %v830 = vpop.permute.xlu0 %829
        %v833 = vsel %vm606, %v713, %v830
        %v835 = vld [vmem:[#allocation11] sm:$0xf]
        %v836 = vld [vmem:[#allocation11 + $0x4] sm:$0xf]
        %v837 = vld [vmem:[#allocation11 + $0x8] sm:$0xf]
        %v838 = vld [vmem:[#allocation11 + $0xc] sm:$0xf]
        %v839 = vld [vmem:[#allocation11 + $0x10] sm:$0xf]
        %v840 = vld [vmem:[#allocation11 + $0x14] sm:$0xf]
        %v841 = vld [vmem:[#allocation11 + $0x18] sm:$0xf]
        %v842 = vld [vmem:[#allocation11 + $0x1c] sm:$0xf]
        %v843 = vld [vmem:[#allocation11 + $0x20] sm:$0xf]
        %v844 = vld [vmem:[#allocation11 + $0x24] sm:$0xf]
        %v845 = vld [vmem:[#allocation11 + $0x28] sm:$0xf]
        %v846 = vld [vmem:[#allocation11 + $0x2c] sm:$0xf]
        %v847 = vld [vmem:[#allocation11 + $0x30] sm:$0xf]
        %v848 = vld [vmem:[#allocation11 + $0x34] sm:$0xf]
        %v849 = vld [vmem:[#allocation11 + $0x38] sm:$0xf]
        %v850 = vld [vmem:[#allocation11 + $0x3c] sm:$0xf]
        %v851 = vld [vmem:[%s6] sm:$0x1]
        %v853 = vlaneseq
        %v854 = vshrl.u32 %v853, 7
        %v855 = vsub.s32 0, %v854
        %v856 = vrot.slane %v851, %v855
        %v874 = vunpack.c.l.b16 %v835
        %v875 = vunpack.c.l.b16 %v836
        %v876 = vunpack.c.l.b16 %v837
        %v877 = vunpack.c.l.b16 %v838
        %v878 = vunpack.c.l.b16 %v839
        %v879 = vunpack.c.l.b16 %v840
        %v880 = vunpack.c.l.b16 %v841
        %v881 = vunpack.c.l.b16 %v842
        %v882 = vunpack.c.l.b16 %v843
        %v883 = vunpack.c.l.b16 %v844
        %v884 = vunpack.c.l.b16 %v845
        %v885 = vunpack.c.l.b16 %v846
        %v886 = vunpack.c.l.b16 %v847
        %v887 = vunpack.c.l.b16 %v848
        %v888 = vunpack.c.l.b16 %v849
        %v889 = vunpack.c.l.b16 %v850
        %v890 = vpack.c.b16 %v875, %v874
        %v891 = vpack.c.b16 %v877, %v876
        %v892 = vpack.c.b16 %v879, %v878
        %v893 = vpack.c.b16 %v881, %v880
        %v894 = vpack.c.b16 %v883, %v882
        %v895 = vpack.c.b16 %v885, %v884
        %v896 = vpack.c.b16 %v887, %v886
        %v897 = vpack.c.b16 %v889, %v888
        %906 = vmatprep.subr.bf16.mxu0 0
        %907 = vmatpush1.bf16.msra.mxu0 %v890
        %908 = vmatprep.subr.bf16.mxu0 0
        %909 = vmatpush1.bf16.msra.mxu0 %v891
        %910 = vmatprep.subr.bf16.mxu0 0
        %911 = vmatpush1.bf16.msra.mxu0 %v892
        %912 = vmatprep.subr.bf16.mxu0 0
        %913 = vmatpush1.bf16.msra.mxu0 %v893
        %914 = vmatprep.subr.bf16.mxu0 0
        %915 = vmatpush1.bf16.msra.mxu0 %v894
        %916 = vmatprep.subr.bf16.mxu0 0
        %917 = vmatpush1.bf16.msra.mxu0 %v895
        %918 = vmatprep.subr.bf16.mxu0 0
        %919 = vmatpush1.bf16.msra.mxu0 %v896
        %920 = vmatprep.subr.bf16.mxu0 0
        %921 = vmatpush1.bf16.msra.mxu0 %v897
        %922 = vmatprep.subr.bf16.mxu0 0
        %923 = vmatpush1.bf16.msra.mxu0 0
        %924 = vmatprep.subr.bf16.mxu0 0
        %925 = vmatpush1.bf16.msra.mxu0 0
        %926 = vmatprep.subr.bf16.mxu0 0
        %927 = vmatpush1.bf16.msra.mxu0 0
        %928 = vmatprep.subr.bf16.mxu0 0
        %929 = vmatpush1.bf16.msra.mxu0 0
        %930 = vmatprep.subr.bf16.mxu0 0
        %931 = vmatpush1.bf16.msra.mxu0 0
        %932 = vmatprep.subr.bf16.mxu0 0
        %933 = vmatpush1.bf16.msra.mxu0 0
        %934 = vmatprep.subr.bf16.mxu0 0
        %935 = vmatpush1.bf16.msra.mxu0 0
        %936 = vmatprep.subr.bf16.mxu0 0
        %937 = vmatpush1.bf16.msra.mxu0 0
        %938 = vmatprep.mubr.bf16.mxu0 0
        %939 = vmatmul.mubr.bf16.gmra.mrb[0].mxu0 %v833
        %v940 = vpop.f32.mrb[0].mxu0
        %v941 = vadd.f32 %v856, %v940
        %v942 = vpop.f32.mrb[0].mxu0
        %v943 = vpop.f32.mrb[0].mxu0
        %v944 = vpop.f32.mrb[0].mxu0
        %945 = vdwg.mxu0
        %946 = vst [vmem:[%s405] sm:$0xff] %v941
        %s947 = sand.u32 %s210, 1
        %s948 = scalar_lea.sflag [#allocation4], %s947
        %s949 = sand.u32 %s210, 1
        %s950 = smul.addr %s949, 8
        %s951 = scalar_lea.vmem [#allocation13], %s950
        // Predicated region
        $region73: #{tpu_custom_call.1} parent=47 // pred_check
          %p952 = pneg %p220
        $region74: #{tpu_custom_call.1} parent=47 // pred_check_branch
          %954 = sbr.rel (%p952) target = $region76
        $region75: #{tpu_custom_call.1} parent=47 // pred_region
          %s956 = ssub.s32 128, 128
          %957 = vsyncadd %s948, %s956
          %s958 = sadd.s32 %s34, %s33
          %s959 = smul.addr %s958, 128
          %s960 = scalar_lea.hbm %s7, %s959
          %s962 = sshll.u32 %s951, 4
          %s963 = int_to_ptr.vmem [resolvable:$true] %s962
          %965 = dma.vmem_to_hbm [thread:$0]  %s963, 128, %s960, %s948
        $region76: #{tpu_custom_call.1} parent=47 // pred_fallthru
          _
      $region48: #{tpu_custom_call.1} parent=5 // pred_fallthru
        _
      %p966 = scmp.le.s32.totalorder 2, %s24
      // Predicated region
      $region77: #{tpu_custom_call.1} parent=5 // pred_check
        %p967 = pneg %p966
      $region78: #{tpu_custom_call.1} parent=5 // pred_check_branch
        %969 = sbr.rel (%p967) target = $region80
      $region79: #{tpu_custom_call.1} parent=5 // pred_region
        %s970 = ssub.s32 %s24, 2
        // Predicated region
        $region81: #{tpu_custom_call.1} parent=79 // pred_check
          %p971 = pneg %p226
        $region82: #{tpu_custom_call.1} parent=79 // pred_check_branch
          %973 = sbr.rel (%p971) target = $region84
        $region83: #{tpu_custom_call.1} parent=79 // pred_region
          %s974 = sand.u32 %s211, 1
          %s975 = scalar_lea.sflag [#allocation4], %s974
          %s976 = sand.u32 %s211, 1
          %s977 = smul.addr %s976, 8
          %s978 = scalar_lea.vmem [#allocation13], %s977
          %979 = dma.done %s975, 128
        $region84: #{tpu_custom_call.1} parent=79 // pred_fallthru
          _
      $region80: #{tpu_custom_call.1} parent=5 // pred_fallthru
        _
    $region6: #{tpu_custom_call.1} parent=1 // loop_footer
      %s28 = sadd.s32 1, %s24
    $region7: #{tpu_custom_call.1} parent=1 // loop_footer_branch
      %23 = sbr.rel target = $region3
    $region8: #{tpu_custom_call.1} parent=1 // loop_exit
      _
    %980 = vsyncpa [#allocation3], 1
    %s981 = scalar_lea.sflag [#allocation3], 1
    %982 = vsyncpa %s981, 1
    %983 = vsyncpa [#allocation6], 1
    %s984 = scalar_lea.sflag [#allocation6], 1
    %985 = vsyncpa %s984, 1
    %986 = vsyncpa [#allocation9], 1
    %987 = vsyncpa [#allocation12], 1
    %988 = vsyncpa [#allocation4], 1
    %s989 = scalar_lea.sflag [#allocation4], 1
    %990 = vsyncpa %s989, 1

</llo_original>
